<compile_context>
chip_gen: v7x
topology: tpu7x:2x2x1
jax: 0.10.0
libtpu: 0.0.40
codegen_flags: <defaults>
</compile_context>

<pallas_src>
import functools

import jax
import jax.numpy as jnp
from jax.experimental import pallas as pl
from jax.experimental.pallas import tpu as pltpu


# ---------------------------------------------------------------------------
# helpers
# ---------------------------------------------------------------------------
def _pick_tile(n: int, target: int) -> int:
    """Largest tile <= target that divides n (falls back to the full dim)."""
    if n <= target:
        return n
    for t in (512, 256, 128, 64, 32, 16, 8):
        if t <= target and n % t == 0:
            return t
    return n


def _vmem_limit_bytes(requested: int) -> int:
    """Generation-aware VMEM limit (v7x has 64 MiB per TensorCore)."""
    cap = 64 * 1024 * 1024  # conservative default = v7x per-TC VMEM
    try:
        info = pltpu.get_tpu_info()
        cap = int(getattr(info, "vmem_capacity_bytes", cap))
    except Exception:
        pass
    headroom = 8 * 1024 * 1024
    return int(max(4 * 1024 * 1024, min(requested, cap - headroom)))


# ---------------------------------------------------------------------------
# Stage 1: per-head QKV projection  x[S,D] @ W_h[D,Dh] -> q/k/v [B,H,S,Dh] bf16
# ---------------------------------------------------------------------------
def _qkv_proj_kernel(x_ref, wq_ref, wk_ref, wv_ref, q_ref, k_ref, v_ref):
    xb = x_ref[...].astype(jnp.bfloat16)                         # [TS, D]
    q_ref[...] = jnp.dot(xb, wq_ref[...],
                         preferred_element_type=jnp.float32).astype(q_ref.dtype)
    k_ref[...] = jnp.dot(xb, wk_ref[...],
                         preferred_element_type=jnp.float32).astype(k_ref.dtype)
    v_ref[...] = jnp.dot(xb, wv_ref[...],
                         preferred_element_type=jnp.float32).astype(v_ref.dtype)


# ---------------------------------------------------------------------------
# Stage 2: flash attention + folded output projection
#   grid = (B, S//TQ, H, S//TK); output block indexed by (b, qi) only, so it is
#   an accumulator across the (h, kt) "arbitrary" axes.
# ---------------------------------------------------------------------------
def _flash_attn_kernel(q_ref, k_ref, v_ref, wo_ref, o_ref,
                       m_sc, l_sc, acc_sc, *, tq, tk, num_kv):
    qi = pl.program_id(1)
    h = pl.program_id(2)
    kt = pl.program_id(3)

    # Zero the output accumulator once per (b, qi) output block.
    @pl.when((h == 0) & (kt == 0))
    def _():
        o_ref[...] = jnp.zeros_like(o_ref)

    # Reset the online-softmax state at the start of every head's KV sweep.
    @pl.when(kt == 0)
    def _():
        m_sc[...] = jnp.full_like(m_sc, -jnp.inf)
        l_sc[...] = jnp.zeros_like(l_sc)
        acc_sc[...] = jnp.zeros_like(acc_sc)

    q_start = qi * tq
    k_start = kt * tk

    # Causal block skip: only process KV blocks with at least one unmasked entry.
    @pl.when(k_start <= q_start + (tq - 1))
    def _():
        # scores: [TQ, TK], bf16 operands, f32 accumulation on the MXU.
        s = jax.lax.dot_general(
            q_ref[...], k_ref[...], (((1,), (1,)), ((), ())),
            preferred_element_type=jnp.float32)

        # Per-block causal mask from global indices (matches -triu(ones,1)*1e9).
        row = q_start + jax.lax.broadcasted_iota(jnp.int32, (tq, tk), 0)
        col = k_start + jax.lax.broadcasted_iota(jnp.int32, (tq, tk), 1)
        s = jnp.where(row >= col, s, -1e9)

        m_prev = m_sc[...]
        m_new = jnp.maximum(m_prev, jnp.max(s, axis=-1, keepdims=True))
        alpha = jnp.exp(m_prev - m_new)
        p = jnp.exp(s - m_new)                                   # [TQ, TK] f32
        l_sc[...] = alpha * l_sc[...] + jnp.sum(p, axis=-1, keepdims=True)
        acc_sc[...] = alpha * acc_sc[...] + jnp.dot(
            p.astype(jnp.bfloat16), v_ref[...],
            preferred_element_type=jnp.float32)                  # [TQ, Dh]
        m_sc[...] = m_new

    # After the last KV block of this head: normalize and accumulate the
    # per-head output projection into the [TQ, D] output block.
    @pl.when(kt == num_kv - 1)
    def _():
        ctx = acc_sc[...] * pl.reciprocal(l_sc[...], approx=True)   # [TQ, Dh] f32
        o_ref[...] += jnp.dot(ctx.astype(jnp.bfloat16), wo_ref[...],
                              preferred_element_type=jnp.float32).astype(o_ref.dtype)


# ---------------------------------------------------------------------------
# Wrapper
# ---------------------------------------------------------------------------
def vanilla_attention_pallas(x, w_query, w_key, w_value, w_output, num_heads):
    """x: [B, S, D] float32.  Returns [B, S, D] float32."""
    B, S, D = x.shape
    assert D % num_heads == 0
    H = num_heads
    Dh = D // H
    scale = D ** (-0.5)   # NOTE: PyTorch module scales by token_dim, not head_dim.

    # Weight prep (cheap; cache these outside if calling repeatedly).
    # Softmax scale folded into W_query; weights pre-split per head.
    wq3 = (w_query.astype(jnp.float32) * scale).astype(jnp.bfloat16) \
        .reshape(D, H, Dh).transpose(1, 0, 2)                     # [H, D, Dh]
    wk3 = w_key.astype(jnp.bfloat16).reshape(D, H, Dh).transpose(1, 0, 2)
    wv3 = w_value.astype(jnp.bfloat16).reshape(D, H, Dh).transpose(1, 0, 2)
    wo3 = w_output.astype(jnp.bfloat16).reshape(H, Dh, D)         # [H, Dh, D]

    # ---------------- Stage 1: QKV projection ----------------
    TS = _pick_tile(S, 512)
    est1 = (2 * (TS * D * 4)          # x (double-buffered)
            + 6 * (D * Dh * 2)        # 3 weights (double-buffered)
            + 6 * (TS * Dh * 2)       # 3 outputs (double-buffered)
            + 4 * (TS * D * 4))       # in-kernel temporaries
    qkv = pl.pallas_call(
        _qkv_proj_kernel,
        out_shape=(
            jax.ShapeDtypeStruct((B, H, S, Dh), jnp.bfloat16),
            jax.ShapeDtypeStruct((B, H, S, Dh), jnp.bfloat16),
            jax.ShapeDtypeStruct((B, H, S, Dh), jnp.bfloat16),
        ),
        grid_spec=pltpu.PrefetchScalarGridSpec(
            num_scalar_prefetch=0,
            grid=(B, S // TS, H),
            in_specs=[
                pl.BlockSpec((None, TS, D), lambda b, si, h: (b, si, 0)),   # x
                pl.BlockSpec((None, D, Dh), lambda b, si, h: (h, 0, 0)),    # Wq[h]
                pl.BlockSpec((None, D, Dh), lambda b, si, h: (h, 0, 0)),    # Wk[h]
                pl.BlockSpec((None, D, Dh), lambda b, si, h: (h, 0, 0)),    # Wv[h]
            ],
            out_specs=(
                pl.BlockSpec((None, None, TS, Dh), lambda b, si, h: (b, h, si, 0)),
                pl.BlockSpec((None, None, TS, Dh), lambda b, si, h: (b, h, si, 0)),
                pl.BlockSpec((None, None, TS, Dh), lambda b, si, h: (b, h, si, 0)),
            ),
        ),
        compiler_params=pltpu.CompilerParams(
            dimension_semantics=("parallel", "parallel", "parallel"),
            vmem_limit_bytes=_vmem_limit_bytes(max(32 << 20, 2 * est1)),
        ),
        cost_estimate=pl.CostEstimate(
            flops=6 * B * S * D * D,
            transcendentals=0,
            bytes_accessed=B * S * D * 4 + 3 * D * D * 2 + 3 * B * S * D * 2,
        ),
    )
    q, k, v = qkv(x, wq3, wk3, wv3)

    # ---------------- Stage 2: flash attention + output projection ----------------
    TQ = _pick_tile(S, 256)
    TK = _pick_tile(S, 256)
    num_q = S // TQ
    num_kv = S // TK

    flash_kernel = functools.partial(_flash_attn_kernel, tq=TQ, tk=TK, num_kv=num_kv)

    est2 = (2 * (TQ * Dh * 2)            # q block
            + 4 * (TK * Dh * 2)          # k, v blocks
            + 2 * (Dh * D * 2)           # Wo[h]
            + 2 * (TQ * D * 4)           # output block
            + (TQ * (Dh + 2) * 4)        # scratch m/l/acc
            + 4 * (TQ * TK * 4))         # s / p temporaries
    out = pl.pallas_call(
        flash_kernel,
        out_shape=jax.ShapeDtypeStruct((B, S, D), x.dtype),
        grid_spec=pltpu.PrefetchScalarGridSpec(
            num_scalar_prefetch=0,
            grid=(B, num_q, H, num_kv),
            in_specs=[
                pl.BlockSpec((None, None, TQ, Dh), lambda b, qi, h, kt: (b, h, qi, 0)),  # q
                pl.BlockSpec((None, None, TK, Dh), lambda b, qi, h, kt: (b, h, kt, 0)),  # k
                pl.BlockSpec((None, None, TK, Dh), lambda b, qi, h, kt: (b, h, kt, 0)),  # v
                pl.BlockSpec((None, Dh, D), lambda b, qi, h, kt: (h, 0, 0)),             # Wo[h]
            ],
            out_specs=pl.BlockSpec((None, TQ, D), lambda b, qi, h, kt: (b, qi, 0)),
            scratch_shapes=[
                pltpu.VMEM((TQ, 1), jnp.float32),    # m: running max
                pltpu.VMEM((TQ, 1), jnp.float32),    # l: running denom
                pltpu.VMEM((TQ, Dh), jnp.float32),   # acc: unnormalized context
            ],
        ),
        compiler_params=pltpu.CompilerParams(
            dimension_semantics=("parallel", "parallel", "arbitrary", "arbitrary"),
            vmem_limit_bytes=_vmem_limit_bytes(max(32 << 20, 2 * est2)),
        ),
        cost_estimate=pl.CostEstimate(
            flops=4 * B * H * S * S * Dh + 2 * B * S * D * D,
            transcendentals=B * H * S * S,
            bytes_accessed=3 * B * H * S * Dh * 2 + H * Dh * D * 2 + B * S * D * 4,
        ),
    )(q, k, v, wo3)
    return out


# ---------------------------------------------------------------------------
# Pure-JAX f32 reference mirroring the PyTorch forward, for verification.
# ---------------------------------------------------------------------------
def vanilla_attention_ref(x, w_query, w_key, w_value, w_output, num_heads):
    B, S, D = x.shape
    Dh = D // num_heads
    mask = -jnp.triu(jnp.ones((S, S), dtype=jnp.float32), k=1) * 1e9

    def mhle(x, W):
        out = jnp.einsum('bij,jk->bik', x, W)                 # [B, S, D]
        out = out.reshape(B, S, num_heads, Dh)
        return jnp.transpose(out, (0, 2, 1, 3))               # [B, H, S, Dh]

    Q, K, V = mhle(x, w_query), mhle(x, w_key), mhle(x, w_value)
    attn = jnp.einsum('bhqd,bhkd->bhqk', Q, K) * (D ** -0.5)
    attn = attn + mask[None, None]
    attn = jax.nn.softmax(attn, axis=-1)
    out = jnp.einsum('bhqk,bhkd->bhqd', attn, V)              # [B, H, S, Dh]
    out = jnp.transpose(out, (0, 2, 1, 3)).reshape(B, S, D)
    return jnp.einsum('bij,jk->bik', out, w_output)


def xavier_uniform(key, shape, dtype=jnp.float32):
    fan_in, fan_out = shape
    a = (6.0 / (fan_in + fan_out)) ** 0.5
    return jax.random.uniform(key, shape, dtype, minval=-a, maxval=a)


if __name__ == "__main__":
    # Small shapes consistent with the module: [batch, seq_len, token_dim]
    batch, seq_len, token_dim, num_heads = 2, 8, 32, 4

    key = jax.random.PRNGKey(0)
    kx, kq, kk, kv, ko = jax.random.split(key, 5)

    x = jax.random.normal(kx, (batch, seq_len, token_dim), dtype=jnp.float32)
    w_query = xavier_uniform(kq, (token_dim, token_dim))
    w_key = xavier_uniform(kk, (token_dim, token_dim))
    w_value = xavier_uniform(kv, (token_dim, token_dim))
    w_output = xavier_uniform(ko, (token_dim, token_dim))

    out = vanilla_attention_pallas(x, w_query, w_key, w_value, w_output, num_heads)
    out = jax.block_until_ready(out)

    ref = vanilla_attention_ref(x, w_query, w_key, w_value, w_output, num_heads)
    assert out.shape == (batch, seq_len, token_dim)
    # Tolerance accounts for bf16 MXU operands / approx reciprocal (f32 accumulation).
    assert jnp.allclose(out, ref, atol=5e-2, rtol=5e-2), "mismatch vs reference"
    assert float(jnp.mean(jnp.abs(out - ref))) < 1e-2, "mean error too large vs reference"

    print("KERNEL_OK")
</pallas_src>

<mosaic_0001>
module attributes {stable_mosaic.version = 11 : i64} {
  func.func @_qkv_proj_kernel(%arg0: i32, %arg1: i32, %arg2: i32, %arg3: memref<1x8x32xf32, #tpu.memory_space<vmem>>, %arg4: memref<1x32x8xbf16, #tpu.memory_space<vmem>>, %arg5: memref<1x32x8xbf16, #tpu.memory_space<vmem>>, %arg6: memref<1x32x8xbf16, #tpu.memory_space<vmem>>, %arg7: memref<1x1x8x8xbf16, #tpu.memory_space<vmem>>, %arg8: memref<1x1x8x8xbf16, #tpu.memory_space<vmem>>, %arg9: memref<1x1x8x8xbf16, #tpu.memory_space<vmem>>) attributes {dimension_semantics = [#tpu.dimension_semantics<parallel>, #tpu.dimension_semantics<parallel>, #tpu.dimension_semantics<parallel>], iteration_bounds = array<i64: 2, 1, 4>, scalar_prefetch = 0 : i64, scratch_operands = 0 : i64, tpu.core_type = #tpu.core_type<tc>, window_params = [{transform_indices = @transform_0, window_bounds = array<i64: 1, 8, 32>}, {transform_indices = @transform_1, window_bounds = array<i64: 1, 32, 8>}, {transform_indices = @transform_2, window_bounds = array<i64: 1, 32, 8>}, {transform_indices = @transform_3, window_bounds = array<i64: 1, 32, 8>}, {transform_indices = @transform_4, window_bounds = array<i64: 1, 1, 8, 8>}, {transform_indices = @transform_5, window_bounds = array<i64: 1, 1, 8, 8>}, {transform_indices = @transform_6, window_bounds = array<i64: 1, 1, 8, 8>}]} {
    %c0 = arith.constant 0 : index
    %c0_0 = arith.constant 0 : index
    %c0_1 = arith.constant 0 : index
    %0 = vector.load %arg3[%c0, %c0_0, %c0_1] : memref<1x8x32xf32, #tpu.memory_space<vmem>>, vector<1x8x32xf32>
    %1 = vector.shape_cast %0 : vector<1x8x32xf32> to vector<8x32xf32>
    %2 = arith.truncf %1 : vector<8x32xf32> to vector<8x32xbf16>
    %c0_2 = arith.constant 0 : index
    %c0_3 = arith.constant 0 : index
    %c0_4 = arith.constant 0 : index
    %3 = vector.load %arg4[%c0_2, %c0_3, %c0_4] : memref<1x32x8xbf16, #tpu.memory_space<vmem>>, vector<1x32x8xbf16>
    %4 = vector.shape_cast %3 : vector<1x32x8xbf16> to vector<32x8xbf16>
    %cst = arith.constant dense<0.000000e+00> : vector<8x8xf32>
    %5 = tpu.matmul %2, %4, %cst {dimension_numbers = #tpu.dot_dimension_numbers<[1], [0], [0], [1], [0, 0, 1, 1], [], []>} : vector<8x32xbf16>, vector<32x8xbf16>, vector<8x8xf32> -> vector<8x8xf32>
    %6 = arith.truncf %5 : vector<8x8xf32> to vector<8x8xbf16>
    %c0_5 = arith.constant 0 : index
    %c0_6 = arith.constant 0 : index
    %c0_7 = arith.constant 0 : index
    %c0_8 = arith.constant 0 : index
    %7 = vector.load %arg7[%c0_5, %c0_6, %c0_7, %c0_8] : memref<1x1x8x8xbf16, #tpu.memory_space<vmem>>, vector<1x1x8x8xbf16>
    %8 = vector.shape_cast %7 : vector<1x1x8x8xbf16> to vector<8x8xbf16>
    %9 = vector.shape_cast %6 : vector<8x8xbf16> to vector<1x1x8x8xbf16>
    tpu.vector_store %arg7[%c0_5, %c0_6, %c0_7, %c0_8], %9 {strides = array<i32>} : memref<1x1x8x8xbf16, #tpu.memory_space<vmem>>, vector<1x1x8x8xbf16>,
    %c0_9 = arith.constant 0 : index
    %c0_10 = arith.constant 0 : index
    %c0_11 = arith.constant 0 : index
    %10 = vector.load %arg5[%c0_9, %c0_10, %c0_11] : memref<1x32x8xbf16, #tpu.memory_space<vmem>>, vector<1x32x8xbf16>
    %11 = vector.shape_cast %10 : vector<1x32x8xbf16> to vector<32x8xbf16>
    %cst_12 = arith.constant dense<0.000000e+00> : vector<8x8xf32>
    %12 = tpu.matmul %2, %11, %cst_12 {dimension_numbers = #tpu.dot_dimension_numbers<[1], [0], [0], [1], [0, 0, 1, 1], [], []>} : vector<8x32xbf16>, vector<32x8xbf16>, vector<8x8xf32> -> vector<8x8xf32>
    %13 = arith.truncf %12 : vector<8x8xf32> to vector<8x8xbf16>
    %c0_13 = arith.constant 0 : index
    %c0_14 = arith.constant 0 : index
    %c0_15 = arith.constant 0 : index
    %c0_16 = arith.constant 0 : index
    %14 = vector.load %arg8[%c0_13, %c0_14, %c0_15, %c0_16] : memref<1x1x8x8xbf16, #tpu.memory_space<vmem>>, vector<1x1x8x8xbf16>
    %15 = vector.shape_cast %14 : vector<1x1x8x8xbf16> to vector<8x8xbf16>
    %16 = vector.shape_cast %13 : vector<8x8xbf16> to vector<1x1x8x8xbf16>
    tpu.vector_store %arg8[%c0_13, %c0_14, %c0_15, %c0_16], %16 {strides = array<i32>} : memref<1x1x8x8xbf16, #tpu.memory_space<vmem>>, vector<1x1x8x8xbf16>,
    %c0_17 = arith.constant 0 : index
    %c0_18 = arith.constant 0 : index
    %c0_19 = arith.constant 0 : index
    %17 = vector.load %arg6[%c0_17, %c0_18, %c0_19] : memref<1x32x8xbf16, #tpu.memory_space<vmem>>, vector<1x32x8xbf16>
    %18 = vector.shape_cast %17 : vector<1x32x8xbf16> to vector<32x8xbf16>
    %cst_20 = arith.constant dense<0.000000e+00> : vector<8x8xf32>
    %19 = tpu.matmul %2, %18, %cst_20 {dimension_numbers = #tpu.dot_dimension_numbers<[1], [0], [0], [1], [0, 0, 1, 1], [], []>} : vector<8x32xbf16>, vector<32x8xbf16>, vector<8x8xf32> -> vector<8x8xf32>
    %20 = arith.truncf %19 : vector<8x8xf32> to vector<8x8xbf16>
    %c0_21 = arith.constant 0 : index
    %c0_22 = arith.constant 0 : index
    %c0_23 = arith.constant 0 : index
    %c0_24 = arith.constant 0 : index
    %21 = vector.load %arg9[%c0_21, %c0_22, %c0_23, %c0_24] : memref<1x1x8x8xbf16, #tpu.memory_space<vmem>>, vector<1x1x8x8xbf16>
    %22 = vector.shape_cast %21 : vector<1x1x8x8xbf16> to vector<8x8xbf16>
    %23 = vector.shape_cast %20 : vector<8x8xbf16> to vector<1x1x8x8xbf16>
    tpu.vector_store %arg9[%c0_21, %c0_22, %c0_23, %c0_24], %23 {strides = array<i32>} : memref<1x1x8x8xbf16, #tpu.memory_space<vmem>>, vector<1x1x8x8xbf16>,
    return
  }
  func.func @transform_0(%arg0: i32, %arg1: i32, %arg2: i32) -> (i32, i32, i32) {
    %c0_i32 = arith.constant 0 : i32
    %c0_i32_0 = arith.constant 0 : i32
    return %arg0, %arg1, %c0_i32 : i32, i32, i32
  }
  func.func @transform_1(%arg0: i32, %arg1: i32, %arg2: i32) -> (i32, i32, i32) {
    %c0_i32 = arith.constant 0 : i32
    %c0_i32_0 = arith.constant 0 : i32
    %c0_i32_1 = arith.constant 0 : i32
    return %arg2, %c0_i32, %c0_i32_0 : i32, i32, i32
  }
  func.func @transform_2(%arg0: i32, %arg1: i32, %arg2: i32) -> (i32, i32, i32) {
    %c0_i32 = arith.constant 0 : i32
    %c0_i32_0 = arith.constant 0 : i32
    %c0_i32_1 = arith.constant 0 : i32
    return %arg2, %c0_i32, %c0_i32_0 : i32, i32, i32
  }
  func.func @transform_3(%arg0: i32, %arg1: i32, %arg2: i32) -> (i32, i32, i32) {
    %c0_i32 = arith.constant 0 : i32
    %c0_i32_0 = arith.constant 0 : i32
    %c0_i32_1 = arith.constant 0 : i32
    return %arg2, %c0_i32, %c0_i32_0 : i32, i32, i32
  }
  func.func @transform_4(%arg0: i32, %arg1: i32, %arg2: i32) -> (i32, i32, i32, i32) {
    %c0_i32 = arith.constant 0 : i32
    %c0_i32_0 = arith.constant 0 : i32
    return %arg0, %arg2, %arg1, %c0_i32 : i32, i32, i32, i32
  }
  func.func @transform_5(%arg0: i32, %arg1: i32, %arg2: i32) -> (i32, i32, i32, i32) {
    %c0_i32 = arith.constant 0 : i32
    %c0_i32_0 = arith.constant 0 : i32
    return %arg0, %arg2, %arg1, %c0_i32 : i32, i32, i32, i32
  }
  func.func @transform_6(%arg0: i32, %arg1: i32, %arg2: i32) -> (i32, i32, i32, i32) {
    %c0_i32 = arith.constant 0 : i32
    %c0_i32_0 = arith.constant 0 : i32
    return %arg0, %arg2, %arg1, %c0_i32 : i32, i32, i32, i32
  }
}

</mosaic_0001>

<llo_original>
// kernel: tpu_custom_call.1
$region0: #{tpu_custom_call.1}
  #allocation0 [shape = 'u32[]', space=smem, size = 0x4, offset = 0x4, fixed_abs, tag = 'smem constant byte address 0x4 - core index']
  #allocation1 [shape = 'u32[144,128]{1,0:T(1,128)}', space=vmem, size = 0x12000, scoped, tag = 'internal scratch']
  %s0 = inlined_call_operand.vmem [shape: f32[2,8,32], index: 0, kind: input, shape index: {}]
  %s1 = inlined_call_operand.vmem [shape: bf16[4,32,8], index: 1, kind: input, shape index: {}]
  %s2 = inlined_call_operand.vmem [shape: bf16[4,32,8], index: 2, kind: input, shape index: {}]
  %s3 = inlined_call_operand.vmem [shape: bf16[4,32,8], index: 3, kind: input, shape index: {}]
  %s4 = inlined_call_operand.hbm [shape: bf16[2,4,8,8], index: 4, kind: output, shape index: {0}]
  %s5 = inlined_call_operand.hbm [shape: bf16[2,4,8,8], index: 5, kind: output, shape index: {1}]
  %s6 = inlined_call_operand.hbm [shape: bf16[2,4,8,8], index: 6, kind: output, shape index: {2}]
  %7 = xla_tuple %s4, %s5, %s6
  %s8 = sld [smem:[#allocation0]]
  $region65: #{tpu_custom_call.1} parent=0
    _
  %s10 = ssub.s32 1, %s8
  %s11 = scalar_select 0, %s10, %s8
  $region1: #{tpu_custom_call.1} parent=0
    #allocation2 [shape = 'u8[4096]{0}', space=vmem, size = 0x1000, scoped, tag = 'output window, operand 0']
    #allocation3 [shape = 's32[2]{0}', space=sflag, size = 0x8, scoped, tag = 'scoped memory for tpu_custom_call.1']
    #allocation4 [shape = 'u8[4096]{0}', space=vmem, size = 0x1000, scoped, tag = 'output window, operand 1']
    #allocation5 [shape = 's32[2]{0}', space=sflag, size = 0x8, scoped, tag = 'scoped memory for tpu_custom_call.1']
    #allocation6 [shape = 'u8[4096]{0}', space=vmem, size = 0x1000, scoped, tag = 'output window, operand 2']
    %12 = vsyncpa [#allocation3], 0
    %s13 = scalar_lea.sflag [#allocation3], 1
    %14 = vsyncpa %s13, 0
    %15 = vsyncpa [#allocation5], 0
    %s16 = scalar_lea.sflag [#allocation5], 1
    %17 = vsyncpa %s16, 0
    loop: start=0, step=1, limit=10
    $region2: #{tpu_custom_call.1} parent=1 // loop_pre_header
      _
    $region3: #{tpu_custom_call.1} parent=1 // loop_header
      %s19 = sphi 0, %s23
      %p20 = scmp.ge.s32.totalorder %s19, 10
      %s26 = sphi 0, %s45
      %s27 = sphi 0, %s41
      %s28 = sphi 0, %s37
      %s29 = sphi 0, %s26
      %s30 = sphi 0, %s27
      %s31 = sphi 0, %s28
      %s32 = sphi 0, %s29
      %s33 = sphi 0, %s30
      %s34 = sphi 0, %s31
      %s50 = sphi 0, %s52
      %s53 = sphi 0, %s50
      %s54 = sphi 0, %s53
      %s70 = sphi 0, %s54
      %s76 = sphi 0, %s78
      %s79 = sphi 0, %s76
      %s80 = sphi 0, %s79
      %s96 = sphi 0, %s80
      %s102 = sphi 0, %s104
      %s105 = sphi 0, %s102
      %s106 = sphi 0, %s105
      %s122 = sphi 0, %s106
      %s128 = sphi 0, %s130
      %s131 = sphi 0, %s128
      %s132 = sphi 0, %s131
      %s148 = sphi 0, %s132
      %s158 = sphi 0, %s160
      %s161 = sphi 0, %s158
      %s162 = sphi 0, %s161
      %s178 = sphi 0, %s162
      %s188 = sphi 0, %s190
      %s191 = sphi 0, %s188
      %s192 = sphi 0, %s191
      %s208 = sphi 0, %s192
      %s218 = sphi 0, %s220
      %s221 = sphi 0, %s218
      %s222 = sphi 0, %s221
      %s238 = sphi 0, %s222
    $region4: #{tpu_custom_call.1} parent=1 // loop_header_branch
      %22 = sbr.rel (%p20) target = $region8
    $region5: #{tpu_custom_call.1} parent=1 // loop_body
      %s24 = ssub.s32 %s19, 1
      %s25 = ssub.s32 %s19, 2
      %s35 = sadd.s32 1, %s28
      %p36 = scmp.ge.s32.totalorder %s35, 4
      %s37 = scalar_select %p36, 0, %s35
      %s38 = sadd.s32 1, %s27
      %s39 = scalar_select %p36, %s38, %s27
      %p40 = scmp.ge.s32.totalorder %s39, 1
      %s41 = scalar_select %p40, 0, %s39
      %s42 = sadd.s32 1, %s26
      %s43 = scalar_select %p40, %s42, %s26
      %p44 = scmp.ge.s32.totalorder %s43, 2
      %s45 = scalar_select %p44, 0, %s43
      %s46 = ssub.s32 %s26, %s45
      %s47 = ssub.s32 %s27, %s41
      %s48 = sor.u32 %s46, %s47
      %p49 = scmp.eq.s32.totalorder %s48, 0
      %s51 = sadd.s32 %s50, 1
      %s52 = scalar_select %p49, %s50, %s51
      %p55 = pneg %p49
      %p56 = scmp.eq.s32.totalorder %s19, 7
      %p57 = por %p55, %p56
      %p58 = scmp.ne.s32.totalorder %s50, %s53
      %p59 = scmp.eq.s32.totalorder %s19, 0
      %p60 = por %p58, %p59
      %p61 = scmp.ne.s32.totalorder %s50, %s53
      %p62 = scmp.eq.s32.totalorder %s24, 7
      %p63 = por %p61, %p62
      %p64 = scmp.ne.s32.totalorder %s53, %s54
      %p65 = scmp.eq.s32.totalorder %s24, 0
      %p66 = por %p64, %p65
      %p67 = scmp.ne.s32.totalorder %s53, %s54
      %p68 = scmp.eq.s32.totalorder %s25, 7
      %p69 = por %p67, %p68
      %p71 = scmp.ne.s32.totalorder %s54, %s70
      %p72 = scmp.eq.s32.totalorder %s25, 0
      %p73 = por %p71, %p72
      %s74 = ssub.s32 %s28, %s37
      %p75 = scmp.eq.s32.totalorder %s74, 0
      %s77 = sadd.s32 %s76, 1
      %s78 = scalar_select %p75, %s76, %s77
      %p81 = pneg %p75
      %p82 = scmp.eq.s32.totalorder %s19, 7
      %p83 = por %p81, %p82
      %p84 = scmp.ne.s32.totalorder %s76, %s79
      %p85 = scmp.eq.s32.totalorder %s19, 0
      %p86 = por %p84, %p85
      %p87 = scmp.ne.s32.totalorder %s76, %s79
      %p88 = scmp.eq.s32.totalorder %s24, 7
      %p89 = por %p87, %p88
      %p90 = scmp.ne.s32.totalorder %s79, %s80
      %p91 = scmp.eq.s32.totalorder %s24, 0
      %p92 = por %p90, %p91
      %p93 = scmp.ne.s32.totalorder %s79, %s80
      %p94 = scmp.eq.s32.totalorder %s25, 7
      %p95 = por %p93, %p94
      %p97 = scmp.ne.s32.totalorder %s80, %s96
      %p98 = scmp.eq.s32.totalorder %s25, 0
      %p99 = por %p97, %p98
      %s100 = ssub.s32 %s28, %s37
      %p101 = scmp.eq.s32.totalorder %s100, 0
      %s103 = sadd.s32 %s102, 1
      %s104 = scalar_select %p101, %s102, %s103
      %p107 = pneg %p101
      %p108 = scmp.eq.s32.totalorder %s19, 7
      %p109 = por %p107, %p108
      %p110 = scmp.ne.s32.totalorder %s102, %s105
      %p111 = scmp.eq.s32.totalorder %s19, 0
      %p112 = por %p110, %p111
      %p113 = scmp.ne.s32.totalorder %s102, %s105
      %p114 = scmp.eq.s32.totalorder %s24, 7
      %p115 = por %p113, %p114
      %p116 = scmp.ne.s32.totalorder %s105, %s106
      %p117 = scmp.eq.s32.totalorder %s24, 0
      %p118 = por %p116, %p117
      %p119 = scmp.ne.s32.totalorder %s105, %s106
      %p120 = scmp.eq.s32.totalorder %s25, 7
      %p121 = por %p119, %p120
      %p123 = scmp.ne.s32.totalorder %s106, %s122
      %p124 = scmp.eq.s32.totalorder %s25, 0
      %p125 = por %p123, %p124
      %s126 = ssub.s32 %s28, %s37
      %p127 = scmp.eq.s32.totalorder %s126, 0
      %s129 = sadd.s32 %s128, 1
      %s130 = scalar_select %p127, %s128, %s129
      %p133 = pneg %p127
      %p134 = scmp.eq.s32.totalorder %s19, 7
      %p135 = por %p133, %p134
      %p136 = scmp.ne.s32.totalorder %s128, %s131
      %p137 = scmp.eq.s32.totalorder %s19, 0
      %p138 = por %p136, %p137
      %p139 = scmp.ne.s32.totalorder %s128, %s131
      %p140 = scmp.eq.s32.totalorder %s24, 7
      %p141 = por %p139, %p140
      %p142 = scmp.ne.s32.totalorder %s131, %s132
      %p143 = scmp.eq.s32.totalorder %s24, 0
      %p144 = por %p142, %p143
      %p145 = scmp.ne.s32.totalorder %s131, %s132
      %p146 = scmp.eq.s32.totalorder %s25, 7
      %p147 = por %p145, %p146
      %p149 = scmp.ne.s32.totalorder %s132, %s148
      %p150 = scmp.eq.s32.totalorder %s25, 0
      %p151 = por %p149, %p150
      %s152 = ssub.s32 %s26, %s45
      %s153 = ssub.s32 %s28, %s37
      %s154 = sor.u32 %s152, %s153
      %s155 = ssub.s32 %s27, %s41
      %s156 = sor.u32 %s154, %s155
      %p157 = scmp.eq.s32.totalorder %s156, 0
      %s159 = sadd.s32 %s158, 1
      %s160 = scalar_select %p157, %s158, %s159
      %p163 = pneg %p157
      %p164 = scmp.eq.s32.totalorder %s19, 7
      %p165 = por %p163, %p164
      %p166 = scmp.ne.s32.totalorder %s158, %s161
      %p167 = scmp.eq.s32.totalorder %s19, 0
      %p168 = por %p166, %p167
      %p169 = scmp.ne.s32.totalorder %s158, %s161
      %p170 = scmp.eq.s32.totalorder %s24, 7
      %p171 = por %p169, %p170
      %p172 = scmp.ne.s32.totalorder %s161, %s162
      %p173 = scmp.eq.s32.totalorder %s24, 0
      %p174 = por %p172, %p173
      %p175 = scmp.ne.s32.totalorder %s161, %s162
      %p176 = scmp.eq.s32.totalorder %s25, 7
      %p177 = por %p175, %p176
      %p179 = scmp.ne.s32.totalorder %s162, %s178
      %p180 = scmp.eq.s32.totalorder %s25, 0
      %p181 = por %p179, %p180
      %s182 = ssub.s32 %s26, %s45
      %s183 = ssub.s32 %s28, %s37
      %s184 = sor.u32 %s182, %s183
      %s185 = ssub.s32 %s27, %s41
      %s186 = sor.u32 %s184, %s185
      %p187 = scmp.eq.s32.totalorder %s186, 0
      %s189 = sadd.s32 %s188, 1
      %s190 = scalar_select %p187, %s188, %s189
      %p193 = pneg %p187
      %p194 = scmp.eq.s32.totalorder %s19, 7
      %p195 = por %p193, %p194
      %p196 = scmp.ne.s32.totalorder %s188, %s191
      %p197 = scmp.eq.s32.totalorder %s19, 0
      %p198 = por %p196, %p197
      %p199 = scmp.ne.s32.totalorder %s188, %s191
      %p200 = scmp.eq.s32.totalorder %s24, 7
      %p201 = por %p199, %p200
      %p202 = scmp.ne.s32.totalorder %s191, %s192
      %p203 = scmp.eq.s32.totalorder %s24, 0
      %p204 = por %p202, %p203
      %p205 = scmp.ne.s32.totalorder %s191, %s192
      %p206 = scmp.eq.s32.totalorder %s25, 7
      %p207 = por %p205, %p206
      %p209 = scmp.ne.s32.totalorder %s192, %s208
      %p210 = scmp.eq.s32.totalorder %s25, 0
      %p211 = por %p209, %p210
      %s212 = ssub.s32 %s26, %s45
      %s213 = ssub.s32 %s28, %s37
      %s214 = sor.u32 %s212, %s213
      %s215 = ssub.s32 %s27, %s41
      %s216 = sor.u32 %s214, %s215
      %p217 = scmp.eq.s32.totalorder %s216, 0
      %s219 = sadd.s32 %s218, 1
      %s220 = scalar_select %p217, %s218, %s219
      %p223 = pneg %p217
      %p224 = scmp.eq.s32.totalorder %s19, 7
      %p225 = por %p223, %p224
      %p226 = scmp.ne.s32.totalorder %s218, %s221
      %p227 = scmp.eq.s32.totalorder %s19, 0
      %p228 = por %p226, %p227
      %p229 = scmp.ne.s32.totalorder %s218, %s221
      %p230 = scmp.eq.s32.totalorder %s24, 7
      %p231 = por %p229, %p230
      %p232 = scmp.ne.s32.totalorder %s221, %s222
      %p233 = scmp.eq.s32.totalorder %s24, 0
      %p234 = por %p232, %p233
      %p235 = scmp.ne.s32.totalorder %s221, %s222
      %p236 = scmp.eq.s32.totalorder %s25, 7
      %p237 = por %p235, %p236
      %p239 = scmp.ne.s32.totalorder %s222, %s238
      %p240 = scmp.eq.s32.totalorder %s25, 0
      %p241 = por %p239, %p240
      %p242 = scmp.le.s32.totalorder 1, %s19
      %p243 = scmp.lt.s32.totalorder %s19, 9
      %p244 = pnand %p242, %p243
      %p245 = pneg %p244
      // Predicated region
      $region9: #{tpu_custom_call.1} parent=5 // pred_check
        _
      $region10: #{tpu_custom_call.1} parent=5 // pred_check_branch
        %247 = sbr.rel (%p244) target = $region12
      $region11: #{tpu_custom_call.1} parent=5 // pred_region
        %s248 = ssub.s32 %s19, 1
      $region12: #{tpu_custom_call.1} parent=5 // pred_fallthru
        _
      %p249 = scmp.lt.s32.totalorder %s19, 8
      // Predicated region
      $region13: #{tpu_custom_call.1} parent=5 // pred_check
        %p250 = pneg %p249
      $region14: #{tpu_custom_call.1} parent=5 // pred_check_branch
        %252 = sbr.rel (%p250) target = $region16
      $region15: #{tpu_custom_call.1} parent=5 // pred_region
        // Predicated region
        $region17: #{tpu_custom_call.1} parent=15 // pred_check
          %p253 = pneg %p60
        $region18: #{tpu_custom_call.1} parent=15 // pred_check_branch
          %255 = sbr.rel (%p253) target = $region20
        $region19: #{tpu_custom_call.1} parent=15 // pred_region
          %p256 = scmp.lt.s32.totalorder %s26, 1
          %s257 = scalar_select %p256, %s26, 1
          %p258 = scmp.lt.s32.totalorder %s27, 0
          %s259 = scalar_select %p258, %s27, 0
          %s260 = sadd.s32 %s259, %s257
          %s261 = smul.addr %s260, 8
          %s262 = scalar_lea.vmem %s0, %s261
        $region20: #{tpu_custom_call.1} parent=15 // pred_fallthru
          _
        // Predicated region
        $region21: #{tpu_custom_call.1} parent=15 // pred_check
          %p263 = pneg %p86
        $region22: #{tpu_custom_call.1} parent=15 // pred_check_branch
          %265 = sbr.rel (%p263) target = $region24
        $region23: #{tpu_custom_call.1} parent=15 // pred_region
          %p266 = scmp.lt.s32.totalorder %s28, 3
          %s267 = scalar_select %p266, %s28, 3
          %s268 = smul.addr %s267, 4
          %s269 = smul.addr %s268, 4
          %s270 = scalar_lea.vmem %s1, %s269
        $region24: #{tpu_custom_call.1} parent=15 // pred_fallthru
          _
        // Predicated region
        $region25: #{tpu_custom_call.1} parent=15 // pred_check
          %p271 = pneg %p112
        $region26: #{tpu_custom_call.1} parent=15 // pred_check_branch
          %273 = sbr.rel (%p271) target = $region28
        $region27: #{tpu_custom_call.1} parent=15 // pred_region
          %p274 = scmp.lt.s32.totalorder %s28, 3
          %s275 = scalar_select %p274, %s28, 3
          %s276 = smul.addr %s275, 4
          %s277 = smul.addr %s276, 4
          %s278 = scalar_lea.vmem %s2, %s277
        $region28: #{tpu_custom_call.1} parent=15 // pred_fallthru
          _
        // Predicated region
        $region29: #{tpu_custom_call.1} parent=15 // pred_check
          %p279 = pneg %p138
        $region30: #{tpu_custom_call.1} parent=15 // pred_check_branch
          %281 = sbr.rel (%p279) target = $region32
        $region31: #{tpu_custom_call.1} parent=15 // pred_region
          %p282 = scmp.lt.s32.totalorder %s28, 3
          %s283 = scalar_select %p282, %s28, 3
          %s284 = smul.addr %s283, 4
          %s285 = smul.addr %s284, 4
          %s286 = scalar_lea.vmem %s3, %s285
        $region32: #{tpu_custom_call.1} parent=15 // pred_fallthru
          _
      $region16: #{tpu_custom_call.1} parent=5 // pred_fallthru
        _
      %p287 = scmp.le.s32.totalorder 1, %s19
      %p288 = scmp.lt.s32.totalorder %s19, 9
      %p289 = pnand %p287, %p288
      %p290 = pneg %p289
      // Predicated region
      $region33: #{tpu_custom_call.1} parent=5 // pred_check
        _
      $region34: #{tpu_custom_call.1} parent=5 // pred_check_branch
        %292 = sbr.rel (%p289) target = $region36
      $region35: #{tpu_custom_call.1} parent=5 // pred_region
        %s293 = ssub.s32 %s19, 1
        %p294 = scmp.lt.s32.totalorder %s29, 1
        %s295 = scalar_select %p294, %s29, 1
        %p296 = scmp.lt.s32.totalorder %s30, 0
        %s297 = scalar_select %p296, %s30, 0
        %s298 = sadd.s32 %s297, %s295
        %s299 = smul.addr %s298, 8
        %s300 = scalar_lea.vmem %s0, %s299
        %p301 = pneg %p66
        %p302 = pneg %p63
        %p303 = scmp.lt.s32.totalorder %s31, 3
        %s304 = scalar_select %p303, %s31, 3
        %s305 = smul.addr %s304, 4
        %s306 = smul.addr %s305, 4
        %s307 = scalar_lea.vmem %s1, %s306
        %p308 = pneg %p92
        %p309 = pneg %p89
        %p310 = scmp.lt.s32.totalorder %s31, 3
        %s311 = scalar_select %p310, %s31, 3
        %s312 = smul.addr %s311, 4
        %s313 = smul.addr %s312, 4
        %s314 = scalar_lea.vmem %s2, %s313
        %p315 = pneg %p118
        %p316 = pneg %p115
        %p317 = scmp.lt.s32.totalorder %s31, 3
        %s318 = scalar_select %p317, %s31, 3
        %s319 = smul.addr %s318, 4
        %s320 = smul.addr %s319, 4
        %s321 = scalar_lea.vmem %s3, %s320
        %p322 = pneg %p144
        %p323 = pneg %p141
        %p324 = pneg %p174
        %p325 = pneg %p171
        %s326 = sand.u32 %s161, 1
        %s327 = scalar_lea.sflag [#allocation3], %s326
        %s328 = sand.u32 %s161, 1
        %s329 = smul.addr %s328, 4
        %s330 = scalar_lea.vmem [#allocation2], %s329
        %p331 = pneg %p204
        %p332 = pneg %p201
        %s333 = sand.u32 %s24, 1
        %s334 = scalar_lea.sflag [#allocation5], %s333
        %s335 = sand.u32 %s191, 1
        %s336 = smul.addr %s335, 4
        %s337 = scalar_lea.vmem [#allocation4], %s336
        %p338 = pneg %p234
        %p339 = pneg %p231
        %s340 = sand.u32 %s24, 1
        %s341 = scalar_lea.sflag [#allocation5], %s340
        %s342 = sand.u32 %s221, 1
        %s343 = smul.addr %s342, 4
        %s344 = scalar_lea.vmem [#allocation6], %s343
        %p345 = scmp.lt.s32.totalorder %s29, 1
        %s346 = scalar_select %p345, %s29, 1
        %p347 = scmp.lt.s32.totalorder %s30, 0
        %s348 = scalar_select %p347, %s30, 0
        %s349 = sadd.s32 %s348, %s346
        %s350 = smul.addr %s349, 8
        %s351 = scalar_lea.vmem %s0, %s350
        %p352 = scmp.lt.s32.totalorder %s31, 3
        %s353 = scalar_select %p352, %s31, 3
        %s354 = smul.addr %s353, 4
        %s355 = smul.addr %s354, 4
        %s356 = scalar_lea.vmem %s1, %s355
        %p357 = scmp.lt.s32.totalorder %s31, 3
        %s358 = scalar_select %p357, %s31, 3
        %s359 = smul.addr %s358, 4
        %s360 = smul.addr %s359, 4
        %s361 = scalar_lea.vmem %s2, %s360
        %p362 = scmp.lt.s32.totalorder %s31, 3
        %s363 = scalar_select %p362, %s31, 3
        %s364 = smul.addr %s363, 4
        %s365 = smul.addr %s364, 4
        %s366 = scalar_lea.vmem %s3, %s365
        %v368 = vld [vmem:[%s351] sm:$0xff]
        %v369 = vpack.c.bf16 %v368, %v368
        %v370 = vld [vmem:[%s356] sm:$0xf]
        %v371 = vld [vmem:[%s356 + $0x4] sm:$0xf]
        %v372 = vld [vmem:[%s356 + $0x8] sm:$0xf]
        %v373 = vld [vmem:[%s356 + $0xc] sm:$0xf]
        %v378 = vunpack.c.l.b16 %v370
        %v379 = vunpack.c.l.b16 %v371
        %v380 = vunpack.c.l.b16 %v372
        %v381 = vunpack.c.l.b16 %v373
        %v382 = vpack.c.b16 %v379, %v378
        %v383 = vpack.c.b16 %v381, %v380
        %vm386 = vcmask 261120
        %v388 = vsel %vm386, %v369, 0
        %390 = vmatprep.subr.bf16.mxu0 0
        %391 = vmatpush1.bf16.msra.mxu0 %v382
        %392 = vmatprep.subr.bf16.mxu0 0
        %393 = vmatpush1.bf16.msra.mxu0 %v383
        %394 = vmatprep.subr.bf16.mxu0 0
        %395 = vmatpush1.bf16.msra.mxu0 0
        %396 = vmatprep.subr.bf16.mxu0 0
        %397 = vmatpush1.bf16.msra.mxu0 0
        %398 = vmatprep.subr.bf16.mxu0 0
        %399 = vmatpush1.bf16.msra.mxu0 0
        %400 = vmatprep.subr.bf16.mxu0 0
        %401 = vmatpush1.bf16.msra.mxu0 0
        %402 = vmatprep.subr.bf16.mxu0 0
        %403 = vmatpush1.bf16.msra.mxu0 0
        %404 = vmatprep.subr.bf16.mxu0 0
        %405 = vmatpush1.bf16.msra.mxu0 0
        %406 = vmatprep.subr.bf16.mxu0 0
        %407 = vmatpush1.bf16.msra.mxu0 0
        %408 = vmatprep.subr.bf16.mxu0 0
        %409 = vmatpush1.bf16.msra.mxu0 0
        %410 = vmatprep.subr.bf16.mxu0 0
        %411 = vmatpush1.bf16.msra.mxu0 0
        %412 = vmatprep.subr.bf16.mxu0 0
        %413 = vmatpush1.bf16.msra.mxu0 0
        %414 = vmatprep.subr.bf16.mxu0 0
        %415 = vmatpush1.bf16.msra.mxu0 0
        %416 = vmatprep.subr.bf16.mxu0 0
        %417 = vmatpush1.bf16.msra.mxu0 0
        %418 = vmatprep.subr.bf16.mxu0 0
        %419 = vmatpush1.bf16.msra.mxu0 0
        %420 = vmatprep.subr.bf16.mxu0 0
        %421 = vmatpush1.bf16.msra.mxu0 0
        %422 = vmatprep.mubr.bf16.mxu0 0
        %423 = vmatmul.mubr.bf16.gmra.mrb[0].mxu0 %v388
        %v424 = vpop.f32.mrb[0].mxu0
        %v425 = vadd.f32 0.0, %v424
        %v426 = vpop.f32.mrb[0].mxu0
        %v427 = vpop.f32.mrb[0].mxu0
        %v428 = vpop.f32.mrb[0].mxu0
        %429 = vdwg.mxu0
        %v430 = vpack.c.bf16 %v425, %v425
        %vm431 = vcmask 60416
        %432 = vst.msk [vmem:[%s330] sm:$0xf] %vm431, %v430
        %v433 = vld [vmem:[%s361] sm:$0xf]
        %v434 = vld [vmem:[%s361 + $0x4] sm:$0xf]
        %v435 = vld [vmem:[%s361 + $0x8] sm:$0xf]
        %v436 = vld [vmem:[%s361 + $0xc] sm:$0xf]
        %v441 = vunpack.c.l.b16 %v433
        %v442 = vunpack.c.l.b16 %v434
        %v443 = vunpack.c.l.b16 %v435
        %v444 = vunpack.c.l.b16 %v436
        %v445 = vpack.c.b16 %v442, %v441
        %v446 = vpack.c.b16 %v444, %v443
        %449 = vmatprep.subr.bf16.mxu0 0
        %450 = vmatpush1.bf16.msra.mxu0 %v445
        %451 = vmatprep.subr.bf16.mxu0 0
        %452 = vmatpush1.bf16.msra.mxu0 %v446
        %453 = vmatprep.subr.bf16.mxu0 0
        %454 = vmatpush1.bf16.msra.mxu0 0
        %455 = vmatprep.subr.bf16.mxu0 0
        %456 = vmatpush1.bf16.msra.mxu0 0
        %457 = vmatprep.subr.bf16.mxu0 0
        %458 = vmatpush1.bf16.msra.mxu0 0
        %459 = vmatprep.subr.bf16.mxu0 0
        %460 = vmatpush1.bf16.msra.mxu0 0
        %461 = vmatprep.subr.bf16.mxu0 0
        %462 = vmatpush1.bf16.msra.mxu0 0
        %463 = vmatprep.subr.bf16.mxu0 0
        %464 = vmatpush1.bf16.msra.mxu0 0
        %465 = vmatprep.subr.bf16.mxu0 0
        %466 = vmatpush1.bf16.msra.mxu0 0
        %467 = vmatprep.subr.bf16.mxu0 0
        %468 = vmatpush1.bf16.msra.mxu0 0
        %469 = vmatprep.subr.bf16.mxu0 0
        %470 = vmatpush1.bf16.msra.mxu0 0
        %471 = vmatprep.subr.bf16.mxu0 0
        %472 = vmatpush1.bf16.msra.mxu0 0
        %473 = vmatprep.subr.bf16.mxu0 0
        %474 = vmatpush1.bf16.msra.mxu0 0
        %475 = vmatprep.subr.bf16.mxu0 0
        %476 = vmatpush1.bf16.msra.mxu0 0
        %477 = vmatprep.subr.bf16.mxu0 0
        %478 = vmatpush1.bf16.msra.mxu0 0
        %479 = vmatprep.subr.bf16.mxu0 0
        %480 = vmatpush1.bf16.msra.mxu0 0
        %481 = vmatprep.mubr.bf16.mxu0 0
        %482 = vmatmul.mubr.bf16.gmra.mrb[0].mxu0 %v388
        %v483 = vpop.f32.mrb[0].mxu0
        %v484 = vadd.f32 0.0, %v483
        %v485 = vpop.f32.mrb[0].mxu0
        %v486 = vpop.f32.mrb[0].mxu0
        %v487 = vpop.f32.mrb[0].mxu0
        %488 = vdwg.mxu0
        %v489 = vpack.c.bf16 %v484, %v484
        %490 = vst.msk [vmem:[%s337] sm:$0xf] %vm431, %v489
        %v491 = vld [vmem:[%s366] sm:$0xf]
        %v492 = vld [vmem:[%s366 + $0x4] sm:$0xf]
        %v493 = vld [vmem:[%s366 + $0x8] sm:$0xf]
        %v494 = vld [vmem:[%s366 + $0xc] sm:$0xf]
        %v499 = vunpack.c.l.b16 %v491
        %v500 = vunpack.c.l.b16 %v492
        %v501 = vunpack.c.l.b16 %v493
        %v502 = vunpack.c.l.b16 %v494
        %v503 = vpack.c.b16 %v500, %v499
        %v504 = vpack.c.b16 %v502, %v501
        %507 = vmatprep.subr.bf16.mxu0 0
        %508 = vmatpush1.bf16.msra.mxu0 %v503
        %509 = vmatprep.subr.bf16.mxu0 0
        %510 = vmatpush1.bf16.msra.mxu0 %v504
        %511 = vmatprep.subr.bf16.mxu0 0
        %512 = vmatpush1.bf16.msra.mxu0 0
        %513 = vmatprep.subr.bf16.mxu0 0
        %514 = vmatpush1.bf16.msra.mxu0 0
        %515 = vmatprep.subr.bf16.mxu0 0
        %516 = vmatpush1.bf16.msra.mxu0 0
        %517 = vmatprep.subr.bf16.mxu0 0
        %518 = vmatpush1.bf16.msra.mxu0 0
        %519 = vmatprep.subr.bf16.mxu0 0
        %520 = vmatpush1.bf16.msra.mxu0 0
        %521 = vmatprep.subr.bf16.mxu0 0
        %522 = vmatpush1.bf16.msra.mxu0 0
        %523 = vmatprep.subr.bf16.mxu0 0
        %524 = vmatpush1.bf16.msra.mxu0 0
        %525 = vmatprep.subr.bf16.mxu0 0
        %526 = vmatpush1.bf16.msra.mxu0 0
        %527 = vmatprep.subr.bf16.mxu0 0
        %528 = vmatpush1.bf16.msra.mxu0 0
        %529 = vmatprep.subr.bf16.mxu0 0
        %530 = vmatpush1.bf16.msra.mxu0 0
        %531 = vmatprep.subr.bf16.mxu0 0
        %532 = vmatpush1.bf16.msra.mxu0 0
        %533 = vmatprep.subr.bf16.mxu0 0
        %534 = vmatpush1.bf16.msra.mxu0 0
        %535 = vmatprep.subr.bf16.mxu0 0
        %536 = vmatpush1.bf16.msra.mxu0 0
        %537 = vmatprep.subr.bf16.mxu0 0
        %538 = vmatpush1.bf16.msra.mxu0 0
        %539 = vmatprep.mubr.bf16.mxu0 0
        %540 = vmatmul.mubr.bf16.gmra.mrb[0].mxu0 %v388
        %v541 = vpop.f32.mrb[0].mxu0
        %v542 = vadd.f32 0.0, %v541
        %v543 = vpop.f32.mrb[0].mxu0
        %v544 = vpop.f32.mrb[0].mxu0
        %v545 = vpop.f32.mrb[0].mxu0
        %546 = vdwg.mxu0
        %v547 = vpack.c.bf16 %v542, %v542
        %548 = vst.msk [vmem:[%s344] sm:$0xf] %vm431, %v547
        %s549 = sand.u32 %s161, 1
        %s550 = scalar_lea.sflag [#allocation3], %s549
        %s551 = sand.u32 %s161, 1
        %s552 = smul.addr %s551, 4
        %s553 = scalar_lea.vmem [#allocation2], %s552
        %s554 = sand.u32 %s24, 1
        %s555 = scalar_lea.sflag [#allocation5], %s554
        %s556 = sand.u32 %s191, 1
        %s557 = smul.addr %s556, 4
        %s558 = scalar_lea.vmem [#allocation4], %s557
        %s559 = sand.u32 %s24, 1
        %s560 = scalar_lea.sflag [#allocation5], %s559
        %s561 = sand.u32 %s221, 1
        %s562 = smul.addr %s561, 4
        %s563 = scalar_lea.vmem [#allocation6], %s562
        // Predicated region
        $region37: #{tpu_custom_call.1} parent=35 // pred_check
          %p564 = pneg %p171
        $region38: #{tpu_custom_call.1} parent=35 // pred_check_branch
          %566 = sbr.rel (%p564) target = $region40
        $region39: #{tpu_custom_call.1} parent=35 // pred_region
          %s568 = ssub.s32 64, 64
          %569 = vsyncadd %s550, %s568
          %s570 = sadd.s32 %s30, %s31
          %s571 = smul.addr %s29, 4
          %s572 = sadd.s32 %s570, %s571
          %s573 = smul.addr %s572, 64
          %s574 = scalar_lea.hbm %s4, %s573
          %s576 = sshll.u32 %s553, 4
          %s577 = int_to_ptr.vmem [resolvable:$true] %s576
          %579 = dma.vmem_to_hbm [thread:$0]  %s577, 64, %s574, %s550
        $region40: #{tpu_custom_call.1} parent=35 // pred_fallthru
          _
        // Predicated region
        $region41: #{tpu_custom_call.1} parent=35 // pred_check
          %p580 = pneg %p201
        $region42: #{tpu_custom_call.1} parent=35 // pred_check_branch
          %582 = sbr.rel (%p580) target = $region44
        $region43: #{tpu_custom_call.1} parent=35 // pred_region
          %s584 = ssub.s32 64, 64
          %585 = vsyncadd %s555, %s584
          %s586 = sadd.s32 %s30, %s31
          %s587 = smul.addr %s29, 4
          %s588 = sadd.s32 %s586, %s587
          %s589 = smul.addr %s588, 64
          %s590 = scalar_lea.hbm %s5, %s589
          %s592 = sshll.u32 %s558, 4
          %s593 = int_to_ptr.vmem [resolvable:$true] %s592
          %595 = dma.vmem_to_hbm [thread:$0]  %s593, 64, %s590, %s555
        $region44: #{tpu_custom_call.1} parent=35 // pred_fallthru
          _
        // Predicated region
        $region45: #{tpu_custom_call.1} parent=35 // pred_check
          %p596 = pneg %p231
        $region46: #{tpu_custom_call.1} parent=35 // pred_check_branch
          %598 = sbr.rel (%p596) target = $region48
        $region47: #{tpu_custom_call.1} parent=35 // pred_region
          %s600 = ssub.s32 64, 64
          %601 = vsyncadd %s560, %s600
          %s602 = sadd.s32 %s30, %s31
          %s603 = smul.addr %s29, 4
          %s604 = sadd.s32 %s602, %s603
          %s605 = smul.addr %s604, 64
          %s606 = scalar_lea.hbm %s6, %s605
          %s608 = sshll.u32 %s563, 4
          %s609 = int_to_ptr.vmem [resolvable:$true] %s608
          %611 = dma.vmem_to_hbm [thread:$0]  %s609, 64, %s606, %s560
        $region48: #{tpu_custom_call.1} parent=35 // pred_fallthru
          _
      $region36: #{tpu_custom_call.1} parent=5 // pred_fallthru
        _
      %p612 = scmp.le.s32.totalorder 2, %s19
      // Predicated region
      $region49: #{tpu_custom_call.1} parent=5 // pred_check
        %p613 = pneg %p612
      $region50: #{tpu_custom_call.1} parent=5 // pred_check_branch
        %615 = sbr.rel (%p613) target = $region52
      $region51: #{tpu_custom_call.1} parent=5 // pred_region
        %s616 = ssub.s32 %s19, 2
        // Predicated region
        $region53: #{tpu_custom_call.1} parent=51 // pred_check
          %p617 = pneg %p177
        $region54: #{tpu_custom_call.1} parent=51 // pred_check_branch
          %619 = sbr.rel (%p617) target = $region56
        $region55: #{tpu_custom_call.1} parent=51 // pred_region
          %s620 = sand.u32 %s162, 1
          %s621 = scalar_lea.sflag [#allocation3], %s620
          %s622 = sand.u32 %s162, 1
          %s623 = smul.addr %s622, 4
          %s624 = scalar_lea.vmem [#allocation2], %s623
          %625 = dma.done %s621, 64
        $region56: #{tpu_custom_call.1} parent=51 // pred_fallthru
          _
        // Predicated region
        $region57: #{tpu_custom_call.1} parent=51 // pred_check
          %p626 = pneg %p207
        $region58: #{tpu_custom_call.1} parent=51 // pred_check_branch
          %628 = sbr.rel (%p626) target = $region60
        $region59: #{tpu_custom_call.1} parent=51 // pred_region
          %s629 = sand.u32 %s25, 1
          %s630 = scalar_lea.sflag [#allocation5], %s629
          %s631 = sand.u32 %s192, 1
          %s632 = smul.addr %s631, 4
          %s633 = scalar_lea.vmem [#allocation4], %s632
          %634 = dma.done %s630, 64
        $region60: #{tpu_custom_call.1} parent=51 // pred_fallthru
          _
        // Predicated region
        $region61: #{tpu_custom_call.1} parent=51 // pred_check
          %p635 = pneg %p237
        $region62: #{tpu_custom_call.1} parent=51 // pred_check_branch
          %637 = sbr.rel (%p635) target = $region64
        $region63: #{tpu_custom_call.1} parent=51 // pred_region
          %s638 = sand.u32 %s25, 1
          %s639 = scalar_lea.sflag [#allocation5], %s638
          %s640 = sand.u32 %s222, 1
          %s641 = smul.addr %s640, 4
          %s642 = scalar_lea.vmem [#allocation6], %s641
          %643 = dma.done %s639, 64
        $region64: #{tpu_custom_call.1} parent=51 // pred_fallthru
          _
      $region52: #{tpu_custom_call.1} parent=5 // pred_fallthru
        _
    $region6: #{tpu_custom_call.1} parent=1 // loop_footer
      %s23 = sadd.s32 1, %s19
    $region7: #{tpu_custom_call.1} parent=1 // loop_footer_branch
      %18 = sbr.rel target = $region3
    $region8: #{tpu_custom_call.1} parent=1 // loop_exit
      _
    %644 = vsyncpa [#allocation3], 1
    %s645 = scalar_lea.sflag [#allocation3], 1
    %646 = vsyncpa %s645, 1
    %647 = vsyncpa [#allocation5], 1
    %s648 = scalar_lea.sflag [#allocation5], 1
    %649 = vsyncpa %s648, 1

</llo_original>
